<compile_context>
chip_gen: v7x
topology: tpu7x:2x2x1
jax: 0.10.0
libtpu: 0.0.40
codegen_flags: <defaults>
</compile_context>

<pallas_src>
import jax
import jax.numpy as jnp
from jax.experimental import pallas as pl
from jax.experimental.pallas import tpu as pltpu


def _round_up(x, m):
    return ((x + m - 1) // m) * m


def mlp_kernel(x_ref, w1_ref, b1_ref, w2_ref, b2_ref, w3_ref, b3_ref, o_ref):
    # layer 1: Linear + tanh (MXU matmul, f32 accumulate; tanh on the EUP in f32)
    h = jnp.dot(x_ref[...], w1_ref[...], preferred_element_type=jnp.float32)
    h = jnp.tanh(h + b1_ref[...])
    # layer 2: Linear + tanh
    h = jnp.dot(h, w2_ref[...], preferred_element_type=jnp.float32)
    h = jnp.tanh(h + b2_ref[...])
    # output layer: Linear (output_activation=None)
    y = jnp.dot(h, w3_ref[...], preferred_element_type=jnp.float32) + b3_ref[...]
    o_ref[...] = y.astype(o_ref.dtype)


def mlp_forward(x, params, *, tile_batch=512):
    """x: [batch, in_dim]; params: list of (W_t, b) with W_t PRE-TRANSPOSED [in, out]."""
    (w1t, b1), (w2t, b2), (w3t, b3) = params
    batch, in_dim = x.shape
    h1, h2, out_dim = w1t.shape[1], w2t.shape[1], w3t.shape[1]

    # Batch tile: multiple of 8 (sublane), capped at tile_batch (keeps the double-
    # buffered x/out tiles + f32 intermediates well inside scoped VMEM, incl. v7x's
    # smaller 64 MiB VMEM).
    tb = min(tile_batch, _round_up(batch, 8))
    padded = _round_up(batch, tb)
    if padded != batch:
        x = jnp.pad(x, ((0, padded - batch), (0, 0)))
    grid = (padded // tb,)

    # Biases as 2D [1, out] rows (broadcast over the batch tile inside the kernel).
    b1r, b2r, b3r = b1[None, :], b2[None, :], b3[None, :]

    # Weights/biases: full-array blocks, same block index every grid step -> they are
    # DMA'd once and stay resident in VMEM across all batch tiles.
    def resident(shape):
        return pl.BlockSpec(shape, lambda i: (0, 0))

    # Advisory cost estimate for XLA scheduling around the custom call.
    flops = 2 * padded * (in_dim * h1 + h1 * h2 + h2 * out_dim)
    transcendentals = padded * (h1 + h2)
    bytes_accessed = (
        x.size * x.dtype.itemsize
        + sum(a.size * a.dtype.itemsize for a in (w1t, b1, w2t, b2, w3t, b3))
        + padded * out_dim * x.dtype.itemsize
    )

    out = pl.pallas_call(
        mlp_kernel,
        out_shape=jax.ShapeDtypeStruct((padded, out_dim), x.dtype),
        grid=grid,
        in_specs=[
            pl.BlockSpec((tb, in_dim), lambda i: (i, 0)),  # x: tiled over batch
            resident((in_dim, h1)),
            resident((1, h1)),
            resident((h1, h2)),
            resident((1, h2)),
            resident((h2, out_dim)),
            resident((1, out_dim)),
        ],
        out_specs=pl.BlockSpec((tb, out_dim), lambda i: (i, 0)),
        compiler_params=pltpu.CompilerParams(
            # Batch tiles are independent -> megacore (v7x 2 TCs) can shard them.
            dimension_semantics=("parallel",),
        ),
        cost_estimate=pl.CostEstimate(
            flops=flops,
            transcendentals=transcendentals,
            bytes_accessed=bytes_accessed,
        ),
    )(x, w1t, b1r, w2t, b2r, w3t, b3r)

    if padded != batch:
        out = out[:batch]
    return out


def init_mlp_params(key, in_dim, h_sizes, out_dim, dtype=jnp.float32):
    """Xavier-normal weights, zero biases (matching the PyTorch __init__).
    Weights are stored PRE-TRANSPOSED as [in, out] so the hot path does no transposes."""
    dims = [in_dim] + list(h_sizes) + [out_dim]
    params = []
    for i in range(len(dims) - 1):
        fan_in, fan_out = dims[i], dims[i + 1]
        key, sub = jax.random.split(key)
        std = (2.0 / (fan_in + fan_out)) ** 0.5
        w = std * jax.random.normal(sub, (fan_out, fan_in), dtype=dtype)  # PyTorch [out, in]
        b = jnp.zeros((fan_out,), dtype=dtype)
        params.append((jnp.asarray(w.T), b))  # store [in, out]
    return params


def mlp_reference(x, params):
    (w1t, b1), (w2t, b2), (w3t, b3) = params
    h = jnp.tanh(x @ w1t + b1)
    h = jnp.tanh(h @ w2t + b2)
    return h @ w3t + b3


if __name__ == "__main__":
    key = jax.random.PRNGKey(0)
    in_dim, h_sizes, out_dim = 16, (32, 32), 4
    params = init_mlp_params(key, in_dim, h_sizes, out_dim)

    # Small shape consistent with the module (TD3 actor/critic style MLP).
    key, kx = jax.random.split(key)
    x_small = jax.random.normal(kx, (2, in_dim), dtype=jnp.float32)
    out_small = mlp_forward(x_small, params)
    jax.block_until_ready(out_small)
    ref_small = mlp_reference(x_small, params)
    assert out_small.shape == (2, out_dim)
    assert jnp.allclose(out_small, ref_small, atol=1e-4, rtol=1e-4)

    # Larger batch exercises the padded / batch-tiled grid path (replay-batch use case).
    key, kx2 = jax.random.split(key)
    x_big = jax.random.normal(kx2, (300, in_dim), dtype=jnp.float32)
    out_big = mlp_forward(x_big, params, tile_batch=128)
    jax.block_until_ready(out_big)
    ref_big = mlp_reference(x_big, params)
    assert out_big.shape == (300, out_dim)
    assert jnp.allclose(out_big, ref_big, atol=1e-4, rtol=1e-4)

    print("KERNEL_OK")
</pallas_src>

<mosaic_0001>
module attributes {stable_mosaic.version = 11 : i64} {
  func.func @mlp_kernel(%arg0: i32, %arg1: memref<8x16xf32, #tpu.memory_space<vmem>>, %arg2: memref<16x32xf32, #tpu.memory_space<vmem>>, %arg3: memref<1x32xf32, #tpu.memory_space<vmem>>, %arg4: memref<32x32xf32, #tpu.memory_space<vmem>>, %arg5: memref<1x32xf32, #tpu.memory_space<vmem>>, %arg6: memref<32x4xf32, #tpu.memory_space<vmem>>, %arg7: memref<1x4xf32, #tpu.memory_space<vmem>>, %arg8: memref<8x4xf32, #tpu.memory_space<vmem>>) attributes {dimension_semantics = [#tpu.dimension_semantics<parallel>], iteration_bounds = array<i64: 1>, scalar_prefetch = 0 : i64, scratch_operands = 0 : i64, tpu.core_type = #tpu.core_type<tc>, window_params = [{transform_indices = @transform_0, window_bounds = array<i64: 8, 16>}, {pipeline_mode = #tpu.pipeline_mode<synchronous>, transform_indices = @transform_1, window_bounds = array<i64: 16, 32>}, {pipeline_mode = #tpu.pipeline_mode<synchronous>, transform_indices = @transform_2, window_bounds = array<i64: 1, 32>}, {pipeline_mode = #tpu.pipeline_mode<synchronous>, transform_indices = @transform_3, window_bounds = array<i64: 32, 32>}, {pipeline_mode = #tpu.pipeline_mode<synchronous>, transform_indices = @transform_4, window_bounds = array<i64: 1, 32>}, {pipeline_mode = #tpu.pipeline_mode<synchronous>, transform_indices = @transform_5, window_bounds = array<i64: 32, 4>}, {pipeline_mode = #tpu.pipeline_mode<synchronous>, transform_indices = @transform_6, window_bounds = array<i64: 1, 4>}, {transform_indices = @transform_7, window_bounds = array<i64: 8, 4>}]} {
    %c0 = arith.constant 0 : index
    %c0_0 = arith.constant 0 : index
    %0 = vector.load %arg1[%c0, %c0_0] : memref<8x16xf32, #tpu.memory_space<vmem>>, vector<8x16xf32>
    %c0_1 = arith.constant 0 : index
    %c0_2 = arith.constant 0 : index
    %1 = vector.load %arg2[%c0_1, %c0_2] : memref<16x32xf32, #tpu.memory_space<vmem>>, vector<16x32xf32>
    %cst = arith.constant dense<0.000000e+00> : vector<8x32xf32>
    %2 = tpu.matmul %0, %1, %cst {dimension_numbers = #tpu.dot_dimension_numbers<[1], [0], [0], [1], [0, 0, 1, 1], [], []>} : vector<8x16xf32>, vector<16x32xf32>, vector<8x32xf32> -> vector<8x32xf32>
    %c0_3 = arith.constant 0 : index
    %c0_4 = arith.constant 0 : index
    %3 = vector.load %arg3[%c0_3, %c0_4] : memref<1x32xf32, #tpu.memory_space<vmem>>, vector<1x32xf32>
    %4 = vector.broadcast %3 : vector<1x32xf32> to vector<8x32xf32>
    %5 = arith.addf %2, %4 : vector<8x32xf32>
    %6 = math.tanh %5 : vector<8x32xf32>
    %c0_5 = arith.constant 0 : index
    %c0_6 = arith.constant 0 : index
    %7 = vector.load %arg4[%c0_5, %c0_6] : memref<32x32xf32, #tpu.memory_space<vmem>>, vector<32x32xf32>
    %cst_7 = arith.constant dense<0.000000e+00> : vector<8x32xf32>
    %8 = tpu.matmul %6, %7, %cst_7 {dimension_numbers = #tpu.dot_dimension_numbers<[1], [0], [0], [1], [0, 0, 1, 1], [], []>} : vector<8x32xf32>, vector<32x32xf32>, vector<8x32xf32> -> vector<8x32xf32>
    %c0_8 = arith.constant 0 : index
    %c0_9 = arith.constant 0 : index
    %9 = vector.load %arg5[%c0_8, %c0_9] : memref<1x32xf32, #tpu.memory_space<vmem>>, vector<1x32xf32>
    %10 = vector.broadcast %9 : vector<1x32xf32> to vector<8x32xf32>
    %11 = arith.addf %8, %10 : vector<8x32xf32>
    %12 = math.tanh %11 : vector<8x32xf32>
    %c0_10 = arith.constant 0 : index
    %c0_11 = arith.constant 0 : index
    %13 = vector.load %arg6[%c0_10, %c0_11] : memref<32x4xf32, #tpu.memory_space<vmem>>, vector<32x4xf32>
    %cst_12 = arith.constant dense<0.000000e+00> : vector<8x4xf32>
    %14 = tpu.matmul %12, %13, %cst_12 {dimension_numbers = #tpu.dot_dimension_numbers<[1], [0], [0], [1], [0, 0, 1, 1], [], []>} : vector<8x32xf32>, vector<32x4xf32>, vector<8x4xf32> -> vector<8x4xf32>
    %c0_13 = arith.constant 0 : index
    %c0_14 = arith.constant 0 : index
    %15 = vector.load %arg7[%c0_13, %c0_14] : memref<1x4xf32, #tpu.memory_space<vmem>>, vector<1x4xf32>
    %16 = vector.broadcast %15 : vector<1x4xf32> to vector<8x4xf32>
    %17 = arith.addf %14, %16 : vector<8x4xf32>
    %c0_15 = arith.constant 0 : index
    %c0_16 = arith.constant 0 : index
    %18 = vector.load %arg8[%c0_15, %c0_16] : memref<8x4xf32, #tpu.memory_space<vmem>>, vector<8x4xf32>
    tpu.vector_store %arg8[%c0_15, %c0_16], %17 {strides = array<i32>} : memref<8x4xf32, #tpu.memory_space<vmem>>, vector<8x4xf32>,
    return
  }
  func.func @transform_0(%arg0: i32) -> (i32, i32) {
    %c0_i32 = arith.constant 0 : i32
    %c0_i32_0 = arith.constant 0 : i32
    return %arg0, %c0_i32 : i32, i32
  }
  func.func @transform_1(%arg0: i32) -> (i32, i32) {
    %c0_i32 = arith.constant 0 : i32
    %c0_i32_0 = arith.constant 0 : i32
    %c0_i32_1 = arith.constant 0 : i32
    return %c0_i32, %c0_i32_0 : i32, i32
  }
  func.func @transform_2(%arg0: i32) -> (i32, i32) {
    %c0_i32 = arith.constant 0 : i32
    %c0_i32_0 = arith.constant 0 : i32
    %c0_i32_1 = arith.constant 0 : i32
    return %c0_i32, %c0_i32_0 : i32, i32
  }
  func.func @transform_3(%arg0: i32) -> (i32, i32) {
    %c0_i32 = arith.constant 0 : i32
    %c0_i32_0 = arith.constant 0 : i32
    %c0_i32_1 = arith.constant 0 : i32
    return %c0_i32, %c0_i32_0 : i32, i32
  }
  func.func @transform_4(%arg0: i32) -> (i32, i32) {
    %c0_i32 = arith.constant 0 : i32
    %c0_i32_0 = arith.constant 0 : i32
    %c0_i32_1 = arith.constant 0 : i32
    return %c0_i32, %c0_i32_0 : i32, i32
  }
  func.func @transform_5(%arg0: i32) -> (i32, i32) {
    %c0_i32 = arith.constant 0 : i32
    %c0_i32_0 = arith.constant 0 : i32
    %c0_i32_1 = arith.constant 0 : i32
    return %c0_i32, %c0_i32_0 : i32, i32
  }
  func.func @transform_6(%arg0: i32) -> (i32, i32) {
    %c0_i32 = arith.constant 0 : i32
    %c0_i32_0 = arith.constant 0 : i32
    %c0_i32_1 = arith.constant 0 : i32
    return %c0_i32, %c0_i32_0 : i32, i32
  }
  func.func @transform_7(%arg0: i32) -> (i32, i32) {
    %c0_i32 = arith.constant 0 : i32
    %c0_i32_0 = arith.constant 0 : i32
    return %arg0, %c0_i32 : i32, i32
  }
}

</mosaic_0001>

<llo_original>
// kernel: tpu_custom_call.1
$region0: #{tpu_custom_call.1}
  #allocation0 [shape = 'u32[]', space=smem, size = 0x4, offset = 0x4, fixed_abs, tag = 'smem constant byte address 0x4 - core index']
  #allocation1 [shape = 'u32[144,128]{1,0:T(1,128)}', space=vmem, size = 0x12000, scoped, tag = 'internal scratch']
  %s0 = inlined_call_operand.vmem [shape: f32[8,16], index: 0, kind: input, shape index: {}]
  %s1 = inlined_call_operand.hbm [shape: f32[16,32], index: 1, kind: input, shape index: {}]
  %s2 = inlined_call_operand.vmem [shape: f32[1,32], index: 2, kind: input, shape index: {}]
  %s3 = inlined_call_operand.vmem [shape: f32[32,32], index: 3, kind: input, shape index: {}]
  %s4 = inlined_call_operand.vmem [shape: f32[1,32], index: 4, kind: input, shape index: {}]
  %s5 = inlined_call_operand.vmem [shape: f32[32,4], index: 5, kind: input, shape index: {}]
  %s6 = inlined_call_operand.vmem [shape: f32[1,4], index: 6, kind: input, shape index: {}]
  %s7 = inlined_call_operand.vmem [shape: f32[8,4], index: 7, kind: output, shape index: {}]
  %s8 = sld [smem:[#allocation0]]
  $region42: #{tpu_custom_call.1} parent=0
    _
  %s10 = ssub.s32 1, %s8
  %s11 = scalar_select 0, %s10, %s8
  $region1: #{tpu_custom_call.1} parent=0
    #allocation2 [shape = 'u8[8192]{0}', space=vmem, size = 0x2000, scoped, tag = 'input window, operand 1, single buffered']
    #allocation3 [shape = 's32[1]{0}', space=sflag, size = 0x4, scoped, tag = 'scoped memory for tpu_custom_call.1']
    %12 = vsyncpa [#allocation3], 0
    // Predicated region
    $region2: #{tpu_custom_call.1} parent=1 // pred_check
      _
    $region3: #{tpu_custom_call.1} parent=1 // pred_check_branch
      %14 = sbr.rel (0) target = $region5
    $region4: #{tpu_custom_call.1} parent=1 // pred_region
      _
    $region5: #{tpu_custom_call.1} parent=1 // pred_fallthru
      _
    // Predicated region
    $region6: #{tpu_custom_call.1} parent=1 // pred_check
      _
    $region7: #{tpu_custom_call.1} parent=1 // pred_check_branch
      %16 = sbr.rel (0) target = $region9
    $region8: #{tpu_custom_call.1} parent=1 // pred_region
      %s18 = ssub.s32 256, 256
      %19 = vsyncadd [#allocation3], %s18
      %s20 = sshll.u32 [#allocation2], 4
      %s21 = int_to_ptr.vmem [resolvable:$true] %s20
      %26 = dma.hbm_to_vmem [thread:$0]  %s1, 256, %s21, [#allocation3], 128, 128, 8
    $region9: #{tpu_custom_call.1} parent=1 // pred_fallthru
      _
    // Predicated region
    $region10: #{tpu_custom_call.1} parent=1 // pred_check
      _
    $region11: #{tpu_custom_call.1} parent=1 // pred_check_branch
      %28 = sbr.rel (0) target = $region13
    $region12: #{tpu_custom_call.1} parent=1 // pred_region
      _
    $region13: #{tpu_custom_call.1} parent=1 // pred_fallthru
      _
    // Predicated region
    $region14: #{tpu_custom_call.1} parent=1 // pred_check
      _
    $region15: #{tpu_custom_call.1} parent=1 // pred_check_branch
      %30 = sbr.rel (0) target = $region17
    $region16: #{tpu_custom_call.1} parent=1 // pred_region
      _
    $region17: #{tpu_custom_call.1} parent=1 // pred_fallthru
      _
    // Predicated region
    $region18: #{tpu_custom_call.1} parent=1 // pred_check
      _
    $region19: #{tpu_custom_call.1} parent=1 // pred_check_branch
      %32 = sbr.rel (0) target = $region21
    $region20: #{tpu_custom_call.1} parent=1 // pred_region
      _
    $region21: #{tpu_custom_call.1} parent=1 // pred_fallthru
      _
    // Predicated region
    $region22: #{tpu_custom_call.1} parent=1 // pred_check
      _
    $region23: #{tpu_custom_call.1} parent=1 // pred_check_branch
      %34 = sbr.rel (0) target = $region25
    $region24: #{tpu_custom_call.1} parent=1 // pred_region
      _
    $region25: #{tpu_custom_call.1} parent=1 // pred_fallthru
      _
    // Predicated region
    $region26: #{tpu_custom_call.1} parent=1 // pred_check
      _
    $region27: #{tpu_custom_call.1} parent=1 // pred_check_branch
      %36 = sbr.rel (0) target = $region29
    $region28: #{tpu_custom_call.1} parent=1 // pred_region
      _
    $region29: #{tpu_custom_call.1} parent=1 // pred_fallthru
      _
    // Predicated region
    $region30: #{tpu_custom_call.1} parent=1 // pred_check
      _
    $region31: #{tpu_custom_call.1} parent=1 // pred_check_branch
      %38 = sbr.rel (0) target = $region33
    $region32: #{tpu_custom_call.1} parent=1 // pred_region
      %39 = dma.done [#allocation3], 256
    $region33: #{tpu_custom_call.1} parent=1 // pred_fallthru
      _
    %v40 = vld [vmem:[%s0] sm:$0xff]
    %v41 = vld [vmem:[#allocation2] sm:$0xff]
    %v42 = vld [vmem:[#allocation2 + $0x8] sm:$0xff]
    %v43 = vld [vmem:[%s2] sm:$0x1]
    %v45 = vlaneseq
    %v46 = vshrl.u32 %v45, 7
    %v47 = vsub.s32 0, %v46
    %v48 = vrot.slane %v43, %v47
    %vm50 = vcmask 130048
    %v52 = vsel %vm50, %v40, 0
    %54 = vmatprep.subr.mxu0 0.0
    %55 = vmatpush1.msra.mxu0 %v41
    %56 = vmatprep.subr.mxu0 0.0
    %57 = vmatpush1.msra.mxu0 %v42
    %58 = vmatprep.subr.mxu0 0.0
    %59 = vmatpush1.msra.mxu0 0.0
    %60 = vmatprep.subr.mxu0 0.0
    %61 = vmatpush1.msra.mxu0 0.0
    %62 = vmatprep.subr.mxu0 0.0
    %63 = vmatpush1.msra.mxu0 0.0
    %64 = vmatprep.subr.mxu0 0.0
    %65 = vmatpush1.msra.mxu0 0.0
    %66 = vmatprep.subr.mxu0 0.0
    %67 = vmatpush1.msra.mxu0 0.0
    %68 = vmatprep.subr.mxu0 0.0
    %69 = vmatpush1.msra.mxu0 0.0
    %70 = vmatprep.subr.mxu0 0.0
    %71 = vmatpush1.msra.mxu0 0.0
    %72 = vmatprep.subr.mxu0 0.0
    %73 = vmatpush1.msra.mxu0 0.0
    %74 = vmatprep.subr.mxu0 0.0
    %75 = vmatpush1.msra.mxu0 0.0
    %76 = vmatprep.subr.mxu0 0.0
    %77 = vmatpush1.msra.mxu0 0.0
    %78 = vmatprep.subr.mxu0 0.0
    %79 = vmatpush1.msra.mxu0 0.0
    %80 = vmatprep.subr.mxu0 0.0
    %81 = vmatpush1.msra.mxu0 0.0
    %82 = vmatprep.subr.mxu0 0.0
    %83 = vmatpush1.msra.mxu0 0.0
    %84 = vmatprep.subr.mxu0 0.0
    %85 = vmatpush1.msra.mxu0 0.0
    %86 = vmatprep.subr.mxu0 0.0
    %87 = vmatpush1.msra.mxu0 0.0
    %88 = vmatprep.subr.mxu0 0.0
    %89 = vmatpush1.msra.mxu0 0.0
    %90 = vmatprep.subr.mxu0 0.0
    %91 = vmatpush1.msra.mxu0 0.0
    %92 = vmatprep.subr.mxu0 0.0
    %93 = vmatpush1.msra.mxu0 0.0
    %94 = vmatprep.subr.mxu0 0.0
    %95 = vmatpush1.msra.mxu0 0.0
    %96 = vmatprep.subr.mxu0 0.0
    %97 = vmatpush1.msra.mxu0 0.0
    %98 = vmatprep.subr.mxu0 0.0
    %99 = vmatpush1.msra.mxu0 0.0
    %100 = vmatprep.subr.mxu0 0.0
    %101 = vmatpush1.msra.mxu0 0.0
    %102 = vmatprep.subr.mxu0 0.0
    %103 = vmatpush1.msra.mxu0 0.0
    %104 = vmatprep.subr.mxu0 0.0
    %105 = vmatpush1.msra.mxu0 0.0
    %106 = vmatprep.subr.mxu0 0.0
    %107 = vmatpush1.msra.mxu0 0.0
    %108 = vmatprep.subr.mxu0 0.0
    %109 = vmatpush1.msra.mxu0 0.0
    %110 = vmatprep.subr.mxu0 0.0
    %111 = vmatpush1.msra.mxu0 0.0
    %112 = vmatprep.subr.mxu0 0.0
    %113 = vmatpush1.msra.mxu0 0.0
    %114 = vmatprep.subr.mxu0 0.0
    %115 = vmatpush1.msra.mxu0 0.0
    %116 = vmatprep.subr.mxu0 0.0
    %117 = vmatpush1.msra.mxu0 0.0
    %118 = vmatprep.mubr.f32.mxu0 0.0
    %119 = vmatmul.mubr.f32.gmra.mrb[0].mxu0 %v52
    %v120 = vpop.f32.mrb[0].mxu0
    %v121 = vadd.f32 %v48, %v120
    %v122 = vpop.f32.mrb[0].mxu0
    %123 = vdwg.mxu0
    %v124 = vtanh.pop %v121
    %v125 = vld [vmem:[%s3] sm:$0xff]
    %v126 = vld [vmem:[%s3 + $0x8] sm:$0xff]
    %v127 = vld [vmem:[%s3 + $0x10] sm:$0xff]
    %v128 = vld [vmem:[%s3 + $0x18] sm:$0xff]
    %v129 = vld [vmem:[%s4] sm:$0x1]
    %v131 = vlaneseq
    %v132 = vshrl.u32 %v131, 7
    %v133 = vsub.s32 0, %v132
    %v134 = vrot.slane %v129, %v133
    %vm136 = vcmask 261120
    %v138 = vsel %vm136, %v124, 0
    %140 = vmatprep.subr.mxu0 0.0
    %141 = vmatpush1.msra.mxu0 %v125
    %142 = vmatprep.subr.mxu0 0.0
    %143 = vmatpush1.msra.mxu0 %v126
    %144 = vmatprep.subr.mxu0 0.0
    %145 = vmatpush1.msra.mxu0 %v127
    %146 = vmatprep.subr.mxu0 0.0
    %147 = vmatpush1.msra.mxu0 %v128
    %148 = vmatprep.subr.mxu0 0.0
    %149 = vmatpush1.msra.mxu0 0.0
    %150 = vmatprep.subr.mxu0 0.0
    %151 = vmatpush1.msra.mxu0 0.0
    %152 = vmatprep.subr.mxu0 0.0
    %153 = vmatpush1.msra.mxu0 0.0
    %154 = vmatprep.subr.mxu0 0.0
    %155 = vmatpush1.msra.mxu0 0.0
    %156 = vmatprep.subr.mxu0 0.0
    %157 = vmatpush1.msra.mxu0 0.0
    %158 = vmatprep.subr.mxu0 0.0
    %159 = vmatpush1.msra.mxu0 0.0
    %160 = vmatprep.subr.mxu0 0.0
    %161 = vmatpush1.msra.mxu0 0.0
    %162 = vmatprep.subr.mxu0 0.0
    %163 = vmatpush1.msra.mxu0 0.0
    %164 = vmatprep.subr.mxu0 0.0
    %165 = vmatpush1.msra.mxu0 0.0
    %166 = vmatprep.subr.mxu0 0.0
    %167 = vmatpush1.msra.mxu0 0.0
    %168 = vmatprep.subr.mxu0 0.0
    %169 = vmatpush1.msra.mxu0 0.0
    %170 = vmatprep.subr.mxu0 0.0
    %171 = vmatpush1.msra.mxu0 0.0
    %172 = vmatprep.subr.mxu0 0.0
    %173 = vmatpush1.msra.mxu0 0.0
    %174 = vmatprep.subr.mxu0 0.0
    %175 = vmatpush1.msra.mxu0 0.0
    %176 = vmatprep.subr.mxu0 0.0
    %177 = vmatpush1.msra.mxu0 0.0
    %178 = vmatprep.subr.mxu0 0.0
    %179 = vmatpush1.msra.mxu0 0.0
    %180 = vmatprep.subr.mxu0 0.0
    %181 = vmatpush1.msra.mxu0 0.0
    %182 = vmatprep.subr.mxu0 0.0
    %183 = vmatpush1.msra.mxu0 0.0
    %184 = vmatprep.subr.mxu0 0.0
    %185 = vmatpush1.msra.mxu0 0.0
    %186 = vmatprep.subr.mxu0 0.0
    %187 = vmatpush1.msra.mxu0 0.0
    %188 = vmatprep.subr.mxu0 0.0
    %189 = vmatpush1.msra.mxu0 0.0
    %190 = vmatprep.subr.mxu0 0.0
    %191 = vmatpush1.msra.mxu0 0.0
    %192 = vmatprep.subr.mxu0 0.0
    %193 = vmatpush1.msra.mxu0 0.0
    %194 = vmatprep.subr.mxu0 0.0
    %195 = vmatpush1.msra.mxu0 0.0
    %196 = vmatprep.subr.mxu0 0.0
    %197 = vmatpush1.msra.mxu0 0.0
    %198 = vmatprep.subr.mxu0 0.0
    %199 = vmatpush1.msra.mxu0 0.0
    %200 = vmatprep.subr.mxu0 0.0
    %201 = vmatpush1.msra.mxu0 0.0
    %202 = vmatprep.subr.mxu0 0.0
    %203 = vmatpush1.msra.mxu0 0.0
    %204 = vmatprep.mubr.f32.mxu0 0.0
    %205 = vmatmul.mubr.f32.gmra.mrb[0].mxu0 %v138
    %v206 = vpop.f32.mrb[0].mxu0
    %v207 = vadd.f32 %v134, %v206
    %v208 = vpop.f32.mrb[0].mxu0
    %209 = vdwg.mxu0
    %v210 = vtanh.pop %v207
    %v211 = vld [vmem:[%s5] sm:$0xff]
    %v212 = vld [vmem:[%s5 + $0x8] sm:$0xff]
    %v213 = vld [vmem:[%s5 + $0x10] sm:$0xff]
    %v214 = vld [vmem:[%s5 + $0x18] sm:$0xff]
    %v215 = vld [vmem:[%s6] sm:$0x1]
    %v217 = vlaneseq
    %v218 = vshrl.u32 %v217, 7
    %v219 = vsub.s32 0, %v218
    %v220 = vrot.slane %v215, %v219
    %v223 = vsel %vm136, %v210, 0
    %225 = vmatprep.subr.mxu0 0.0
    %226 = vmatpush1.msra.mxu0 %v211
    %227 = vmatprep.subr.mxu0 0.0
    %228 = vmatpush1.msra.mxu0 %v212
    %229 = vmatprep.subr.mxu0 0.0
    %230 = vmatpush1.msra.mxu0 %v213
    %231 = vmatprep.subr.mxu0 0.0
    %232 = vmatpush1.msra.mxu0 %v214
    %233 = vmatprep.subr.mxu0 0.0
    %234 = vmatpush1.msra.mxu0 0.0
    %235 = vmatprep.subr.mxu0 0.0
    %236 = vmatpush1.msra.mxu0 0.0
    %237 = vmatprep.subr.mxu0 0.0
    %238 = vmatpush1.msra.mxu0 0.0
    %239 = vmatprep.subr.mxu0 0.0
    %240 = vmatpush1.msra.mxu0 0.0
    %241 = vmatprep.subr.mxu0 0.0
    %242 = vmatpush1.msra.mxu0 0.0
    %243 = vmatprep.subr.mxu0 0.0
    %244 = vmatpush1.msra.mxu0 0.0
    %245 = vmatprep.subr.mxu0 0.0
    %246 = vmatpush1.msra.mxu0 0.0
    %247 = vmatprep.subr.mxu0 0.0
    %248 = vmatpush1.msra.mxu0 0.0
    %249 = vmatprep.subr.mxu0 0.0
    %250 = vmatpush1.msra.mxu0 0.0
    %251 = vmatprep.subr.mxu0 0.0
    %252 = vmatpush1.msra.mxu0 0.0
    %253 = vmatprep.subr.mxu0 0.0
    %254 = vmatpush1.msra.mxu0 0.0
    %255 = vmatprep.subr.mxu0 0.0
    %256 = vmatpush1.msra.mxu0 0.0
    %257 = vmatprep.subr.mxu0 0.0
    %258 = vmatpush1.msra.mxu0 0.0
    %259 = vmatprep.subr.mxu0 0.0
    %260 = vmatpush1.msra.mxu0 0.0
    %261 = vmatprep.subr.mxu0 0.0
    %262 = vmatpush1.msra.mxu0 0.0
    %263 = vmatprep.subr.mxu0 0.0
    %264 = vmatpush1.msra.mxu0 0.0
    %265 = vmatprep.subr.mxu0 0.0
    %266 = vmatpush1.msra.mxu0 0.0
    %267 = vmatprep.subr.mxu0 0.0
    %268 = vmatpush1.msra.mxu0 0.0
    %269 = vmatprep.subr.mxu0 0.0
    %270 = vmatpush1.msra.mxu0 0.0
    %271 = vmatprep.subr.mxu0 0.0
    %272 = vmatpush1.msra.mxu0 0.0
    %273 = vmatprep.subr.mxu0 0.0
    %274 = vmatpush1.msra.mxu0 0.0
    %275 = vmatprep.subr.mxu0 0.0
    %276 = vmatpush1.msra.mxu0 0.0
    %277 = vmatprep.subr.mxu0 0.0
    %278 = vmatpush1.msra.mxu0 0.0
    %279 = vmatprep.subr.mxu0 0.0
    %280 = vmatpush1.msra.mxu0 0.0
    %281 = vmatprep.subr.mxu0 0.0
    %282 = vmatpush1.msra.mxu0 0.0
    %283 = vmatprep.subr.mxu0 0.0
    %284 = vmatpush1.msra.mxu0 0.0
    %285 = vmatprep.subr.mxu0 0.0
    %286 = vmatpush1.msra.mxu0 0.0
    %287 = vmatprep.subr.mxu0 0.0
    %288 = vmatpush1.msra.mxu0 0.0
    %289 = vmatprep.mubr.f32.mxu0 0.0
    %290 = vmatmul.mubr.f32.gmra.mrb[0].mxu0 %v223
    %v291 = vpop.f32.mrb[0].mxu0
    %v292 = vadd.f32 %v220, %v291
    %v293 = vpop.f32.mrb[0].mxu0
    %294 = vdwg.mxu0
    %vm295 = vcmask 31744
    %296 = vst.msk [vmem:[%s7] sm:$0xff] %vm295, %v292
    // Predicated region
    $region34: #{tpu_custom_call.1} parent=1 // pred_check
      _
    $region35: #{tpu_custom_call.1} parent=1 // pred_check_branch
      %298 = sbr.rel (0) target = $region37
    $region36: #{tpu_custom_call.1} parent=1 // pred_region
      _
    $region37: #{tpu_custom_call.1} parent=1 // pred_fallthru
      _
    // Predicated region
    $region38: #{tpu_custom_call.1} parent=1 // pred_check
      _
    $region39: #{tpu_custom_call.1} parent=1 // pred_check_branch
      %300 = sbr.rel (0) target = $region41
    $region40: #{tpu_custom_call.1} parent=1 // pred_region
      _
    $region41: #{tpu_custom_call.1} parent=1 // pred_fallthru
      _
    %301 = vsyncpa [#allocation3], 1

</llo_original>
